<compile_context>
chip_gen: v7x
topology: tpu7x:2x2x1
jax: 0.10.0
libtpu: 0.0.40
codegen_flags: <defaults>
</compile_context>

<pallas_src>
import functools
import math

import jax
import jax.numpy as jnp
from jax import lax
from jax.experimental import pallas as pl
from jax.experimental.pallas import tpu as pltpu


_ATTN_VMEM_LIMIT = 48 * 1024 * 1024   # explicit scoped-VMEM budget (safe on v7x's 64 MiB)


def _round_up(x, m):
    return ((x + m - 1) // m) * m


# --------------------------------------------------------------------------
# Kernel 1: tiled dense layer  y = x @ W + b   (K-reduction accumulator)
# --------------------------------------------------------------------------
def _linear_kernel(x_ref, w_ref, b_ref, o_ref, acc_ref):
    @pl.when(pl.program_id(2) == 0)
    def _():
        acc_ref[...] = jnp.zeros_like(acc_ref)

    acc_ref[...] += jnp.dot(x_ref[...], w_ref[...],
                            preferred_element_type=jnp.float32)

    @pl.when(pl.program_id(2) == pl.num_programs(2) - 1)
    def _():
        o_ref[...] = (acc_ref[...] + b_ref[...].astype(jnp.float32)
                      ).astype(o_ref.dtype)


def _pick_tile(dim, candidates):
    for c in candidates:
        if dim % c == 0:
            return c
    return dim  # full extent is always a legal block


def linear(x2d, w, b, *, tm=256):
    """x2d: (M, K), w: (K, Nout), b: (1, Nout) -> (M, Nout)."""
    M, K = x2d.shape
    _, Nout = w.shape
    # Fixed, large M tile; pad the ragged remainder instead of collapsing tm
    # (e.g. M = 8*197 = 1576 now runs with tm=256 rather than tm=8).
    tm = min(tm, _round_up(M, 8))
    Mp = _round_up(M, tm)
    if Mp != M:
        x2d = jnp.pad(x2d, ((0, Mp - M), (0, 0)))
    tk = _pick_tile(K, (512, 256, 128))
    tn = _pick_tile(Nout, (1024, 512, 256, 128))
    grid = (Mp // tm, Nout // tn, K // tk)
    cost = pl.CostEstimate(
        flops=2 * Mp * K * Nout,
        transcendentals=0,
        bytes_accessed=(Mp * K + K * Nout + Nout + Mp * Nout)
        * x2d.dtype.itemsize)
    out = pl.pallas_call(
        _linear_kernel,
        out_shape=jax.ShapeDtypeStruct((Mp, Nout), x2d.dtype),
        grid_spec=pltpu.PrefetchScalarGridSpec(
            num_scalar_prefetch=0,
            grid=grid,
            in_specs=[
                pl.BlockSpec((tm, tk), lambda i, j, k: (i, k)),
                pl.BlockSpec((tk, tn), lambda i, j, k: (k, j)),
                pl.BlockSpec((1, tn), lambda i, j, k: (0, j)),
            ],
            out_specs=pl.BlockSpec((tm, tn), lambda i, j, k: (i, j)),
            scratch_shapes=[pltpu.VMEM((tm, tn), jnp.float32)],
        ),
        compiler_params=pltpu.CompilerParams(
            dimension_semantics=("parallel", "parallel", "arbitrary")),
        cost_estimate=cost,
    )(x2d, w, b)
    return out if Mp == M else out[:M]


# --------------------------------------------------------------------------
# Kernel 2: multi-head attention reading the fused (B, N, 3*C) qkv buffer
# --------------------------------------------------------------------------
def _qk_scores(qh, kh):
    # Contract the last dims of both operands so Mosaic feeds k to the MXU
    # untransposed (no XLU transpose of the (N, hd) k slice).
    return lax.dot_general(qh, kh, (((1,), (1,)), ((), ())),
                           preferred_element_type=jnp.float32)


def _softmax_head(qh, kh, vh, exp_dtype):
    """qh is pre-scaled.  Returns the f32 (N, hd) attention output for one head."""
    s = _qk_scores(qh, kh)                                   # (N, N) f32
    s = s - jnp.max(s, axis=-1, keepdims=True)
    p = jnp.exp(s.astype(exp_dtype))                         # bf16 exp when inputs are bf16
    l = jnp.sum(p, axis=-1, keepdims=True).astype(jnp.float32)
    o = jnp.dot(p.astype(vh.dtype), vh, preferred_element_type=jnp.float32)
    # Deferred normalization: N*hd muls instead of N*N; approx recip -> EUP slot.
    return o * pl.reciprocal(l, approx=True)


def _attn_group_kernel(q_ref, k_ref, v_ref, o_ref, *, scale, hpb, hd, exp_dtype):
    """Single-pass path.  q/k/v refs: (N, hpb*hd) lane-dense head-group tiles."""
    q = q_ref[...] * scale       # fold scale into q (N*W muls instead of N*N)
    k = k_ref[...]
    v = v_ref[...]
    outs = [
        _softmax_head(q[:, h * hd:(h + 1) * hd],
                      k[:, h * hd:(h + 1) * hd],
                      v[:, h * hd:(h + 1) * hd], exp_dtype)
        for h in range(hpb)
    ]
    o = outs[0] if hpb == 1 else jnp.concatenate(outs, axis=-1)
    o_ref[...] = o.astype(o_ref.dtype)      # single full-width lane-dense store


def _flash_group_kernel(q_ref, k_ref, v_ref, o_ref, acc_ref, m_ref, l_ref,
                        *, scale, hpb, hd, exp_dtype):
    """Flash (online-softmax) path.  Grid = (B, G, q_tiles, kv_tiles).
    q/o refs: (tq, W); k/v refs: (tkv, W); per-head m/l and (tq, W) acc scratch."""
    kv_i = pl.program_id(3)

    @pl.when(kv_i == 0)
    def _():
        m_ref[...] = jnp.full_like(m_ref, -jnp.inf)
        l_ref[...] = jnp.zeros_like(l_ref)
        acc_ref[...] = jnp.zeros_like(acc_ref)

    q = q_ref[...] * scale
    k = k_ref[...]
    v = v_ref[...]
    for h in range(hpb):
        sl = slice(h * hd, (h + 1) * hd)
        s = _qk_scores(q[:, sl], k[:, sl])                    # (tq, tkv) f32
        m_prev = m_ref[:, h:h + 1]
        m_new = jnp.maximum(m_prev, jnp.max(s, axis=-1, keepdims=True))
        alpha = jnp.exp(m_prev - m_new)                       # (tq, 1) f32
        p = jnp.exp((s - m_new).astype(exp_dtype))
        l_ref[:, h:h + 1] = (alpha * l_ref[:, h:h + 1]
                             + jnp.sum(p, axis=-1, keepdims=True).astype(jnp.float32))
        pv = jnp.dot(p.astype(v.dtype), v[:, sl],
                     preferred_element_type=jnp.float32)
        acc_ref[:, sl] = alpha * acc_ref[:, sl] + pv
        m_ref[:, h:h + 1] = m_new

    @pl.when(kv_i == pl.num_programs(3) - 1)
    def _():
        outs = [acc_ref[:, h * hd:(h + 1) * hd]
                * pl.reciprocal(l_ref[:, h:h + 1], approx=True)
                for h in range(hpb)]
        o = outs[0] if hpb == 1 else jnp.concatenate(outs, axis=-1)
        o_ref[...] = o.astype(o_ref.dtype)


def _heads_per_block(num_heads, head_dim):
    """Smallest head packing whose tile width is a multiple of 128 lanes."""
    if head_dim % 128 == 0:
        return 1
    hpb = 128 // math.gcd(head_dim, 128)
    if hpb <= num_heads and num_heads % hpb == 0:
        return hpb
    return None


def _choose_heads_per_block(num_heads, head_dim, max_width=512):
    """Minimal 128-lane packing, widened (better DMA burst granularity on the
    strided column slabs) while the group width stays <= max_width."""
    hpb = _heads_per_block(num_heads, head_dim)
    if hpb is None:
        return None
    while (2 * hpb <= num_heads and num_heads % (2 * hpb) == 0
           and 2 * hpb * head_dim <= max_width):
        hpb *= 2
    return hpb


def _padded_head_dim(num_heads, head_dim):
    """Smallest padded head_dim that makes 128-lane head packing possible."""
    align = 128 // math.gcd(num_heads, 128)
    return _round_up(head_dim, align)


def multihead_attention(qkv3, num_heads, scale, *, q_block=256, kv_block=256,
                        flash_min_n=1024, max_group_width=512):
    """qkv3: (B, N, 3*C) fused projection output, columns laid out as
    [q_h0..q_h{H-1} | k_h0.. | v_h0..].  Returns merged-head (B, N, C).

    flash_min_n: sequence length at which the online-softmax (flash) path is
    used instead of materializing per-head (N, N) scores; ~1024 is appropriate
    for v7x (64 MiB VMEM), ~2048 for v6e/v5e."""
    B, N, C3 = qkv3.shape
    C = C3 // 3
    hd = C // num_heads
    hpb = _choose_heads_per_block(num_heads, hd, max_group_width)
    if hpb is None:
        raise ValueError("head_dim cannot be packed to a 128-lane multiple; "
                         "pad head_dim in the qkv projection (see attention_forward)")
    W = hpb * hd                      # multiple of 128 -> lane-dense tiles
    G = C // W                        # head groups per batch
    exp_dtype = jnp.bfloat16 if qkv3.dtype == jnp.bfloat16 else jnp.float32
    cost = pl.CostEstimate(
        flops=4 * B * num_heads * N * N * hd,
        transcendentals=B * num_heads * (N * N + N),
        bytes_accessed=(qkv3.size + B * N * C) * qkv3.dtype.itemsize)
    # Megacore note: grid leading axes are "parallel"; B*G >= 2 in practice so
    # both v7x TensorCores get work.
    # TODO(synk): if profiling shows exposed DMA on the k/v column slabs, add
    # pipeline_mode=pl.Buffered(3) to the k/v BlockSpecs.

    if N >= flash_min_n and N % q_block == 0 and N % kv_block == 0:
        nq, nkv = N // q_block, N // kv_block
        kern = functools.partial(_flash_group_kernel, scale=scale, hpb=hpb,
                                 hd=hd, exp_dtype=exp_dtype)
        return pl.pallas_call(
            kern,
            out_shape=jax.ShapeDtypeStruct((B, N, C), qkv3.dtype),
            grid_spec=pltpu.PrefetchScalarGridSpec(
                num_scalar_prefetch=0,
                grid=(B, G, nq, nkv),
                in_specs=[
                    pl.BlockSpec((None, q_block, W),
                                 lambda b, g, qi, ki: (b, qi, g)),
                    pl.BlockSpec((None, kv_block, W),
                                 lambda b, g, qi, ki: (b, ki, G + g)),
                    pl.BlockSpec((None, kv_block, W),
                                 lambda b, g, qi, ki: (b, ki, 2 * G + g)),
                ],
                out_specs=pl.BlockSpec((None, q_block, W),
                                       lambda b, g, qi, ki: (b, qi, g)),
                scratch_shapes=[
                    pltpu.VMEM((q_block, W), jnp.float32),     # acc
                    pltpu.VMEM((q_block, hpb), jnp.float32),   # running max
                    pltpu.VMEM((q_block, hpb), jnp.float32),   # running denom
                ],
            ),
            compiler_params=pltpu.CompilerParams(
                dimension_semantics=("parallel", "parallel", "parallel",
                                     "arbitrary"),
                vmem_limit_bytes=_ATTN_VMEM_LIMIT),
            cost_estimate=cost,
        )(qkv3, qkv3, qkv3)

    # Short-sequence single-pass path (per-head (N, N) scores fit comfortably).
    kern = functools.partial(_attn_group_kernel, scale=scale, hpb=hpb, hd=hd,
                             exp_dtype=exp_dtype)
    return pl.pallas_call(
        kern,
        out_shape=jax.ShapeDtypeStruct((B, N, C), qkv3.dtype),
        grid_spec=pltpu.PrefetchScalarGridSpec(
            num_scalar_prefetch=0,
            grid=(B, G),
            in_specs=[
                pl.BlockSpec((None, N, W), lambda b, g: (b, 0, g)),
                pl.BlockSpec((None, N, W), lambda b, g: (b, 0, G + g)),
                pl.BlockSpec((None, N, W), lambda b, g: (b, 0, 2 * G + g)),
            ],
            out_specs=pl.BlockSpec((None, N, W), lambda b, g: (b, 0, g)),
        ),
        compiler_params=pltpu.CompilerParams(
            dimension_semantics=("parallel", "parallel"),
            vmem_limit_bytes=_ATTN_VMEM_LIMIT),
        cost_estimate=cost,
    )(qkv3, qkv3, qkv3)


# --------------------------------------------------------------------------
# Full Attention module forward
# --------------------------------------------------------------------------
def attention_forward(x, params, num_heads):
    """x: (B, N, C).  Reproduces the PyTorch Attention.forward semantics."""
    B, N, C = x.shape
    hd = C // num_heads
    scale = hd ** (-0.5)

    w_qkv, b_qkv = params["w_qkv"], params["b_qkv"]
    w_proj, b_proj = params["w_proj"], params["b_proj"]

    hd_eff = hd
    if _heads_per_block(num_heads, hd) is None:
        # Zero-pad each head's columns in the qkv projection (and matching
        # w_proj rows) so the lane-dense packed attention path is always taken.
        # Zero k/v padding leaves scores and outputs mathematically unchanged.
        # TODO(synk): in a real model, pre-transform these params once at init.
        hd_eff = _padded_head_dim(num_heads, hd)
        pad = hd_eff - hd
        w_qkv = jnp.pad(w_qkv.reshape(C, 3, num_heads, hd),
                        ((0, 0), (0, 0), (0, 0), (0, pad))
                        ).reshape(C, 3 * num_heads * hd_eff)
        b_qkv = jnp.pad(b_qkv.reshape(1, 3, num_heads, hd),
                        ((0, 0), (0, 0), (0, 0), (0, pad))
                        ).reshape(1, 3 * num_heads * hd_eff)
        w_proj = jnp.pad(w_proj.reshape(num_heads, hd, C),
                         ((0, 0), (0, pad), (0, 0))
                         ).reshape(num_heads * hd_eff, C)
    C_eff = num_heads * hd_eff

    # fused qkv projection; result stays in (B, N, 3*C_eff) layout (no transposes).
    qkv = linear(x.reshape(B * N, C), w_qkv, b_qkv)
    qkv = qkv.reshape(B, N, 3 * C_eff)

    # per-head scaled-dot-product attention; output already merged-head layout.
    o = multihead_attention(qkv, num_heads, scale)

    # output projection
    y = linear(o.reshape(B * N, C_eff), w_proj, b_proj)
    return y.reshape(B, N, C)
    # attn_drop / proj_drop have p=0.0 (identity in eval) -> omitted.


def init_params(key, dim):
    """Deterministic parameter init (shapes from Attention.__init__)."""
    k1, k2, k3 = jax.random.split(key, 3)
    w_qkv = jax.random.normal(k1, (dim, 3 * dim), jnp.float32) * 0.02
    b_qkv = jnp.zeros((1, 3 * dim), jnp.float32)        # qkv_bias=False
    w_proj = jax.random.normal(k2, (dim, dim), jnp.float32) * 0.02
    b_proj = jax.random.normal(k3, (1, dim), jnp.float32) * 0.02
    return dict(w_qkv=w_qkv, b_qkv=b_qkv, w_proj=w_proj, b_proj=b_proj)


# --------------------------------------------------------------------------
# Pure-JAX references for correctness checking
# --------------------------------------------------------------------------
def reference_forward(x, params, num_heads):
    B, N, C = x.shape
    hd = C // num_heads
    scale = hd ** (-0.5)
    qkv = x.reshape(B * N, C) @ params["w_qkv"] + params["b_qkv"]
    qkv = qkv.reshape(B, N, 3, num_heads, hd).transpose(2, 0, 3, 1, 4)
    q, k, v = qkv[0], qkv[1], qkv[2]
    s = jnp.einsum("bhqd,bhkd->bhqk", q, k) * scale
    p = jax.nn.softmax(s, axis=-1)
    o = jnp.einsum("bhqk,bhkd->bhqd", p, v)
    o = o.transpose(0, 2, 1, 3).reshape(B * N, C)
    y = o @ params["w_proj"] + params["b_proj"]
    return y.reshape(B, N, C)


def mha_reference(qkv3, num_heads, scale):
    B, N, C3 = qkv3.shape
    C = C3 // 3
    hd = C // num_heads
    qkv = qkv3.reshape(B, N, 3, num_heads, hd).transpose(2, 0, 3, 1, 4)
    q, k, v = qkv[0], qkv[1], qkv[2]
    s = jnp.einsum("bhqd,bhkd->bhqk", q, k) * scale
    p = jax.nn.softmax(s, axis=-1)
    o = jnp.einsum("bhqk,bhkd->bhqd", p, v)
    return o.transpose(0, 2, 1, 3).reshape(B, N, C)


if __name__ == "__main__":
    # head_dim = 32 -> heads pack into 128/256-lane attention tiles; all linear
    # tiles are (8,128)-aligned.
    B, N, C = 2, 8, 256
    num_heads = 8

    key = jax.random.PRNGKey(0)
    kx, kp, kq = jax.random.split(key, 3)
    x = jax.random.normal(kx, (B, N, C), jnp.float32)
    params = init_params(kp, C)

    # Per perf review: run activations/weights (and hence q/k/v) in bf16 with
    # f32 MXU accumulation.  The reference runs in f32 on the same
    # bf16-rounded values, so the comparison isolates in-kernel error.
    xb = x.astype(jnp.bfloat16)
    params_b = {k: v.astype(jnp.bfloat16) for k, v in params.items()}

    out = jax.block_until_ready(attention_forward(xb, params_b, num_heads))
    assert out.shape == (B, N, C)
    ref = reference_forward(
        xb.astype(jnp.float32),
        {k: v.astype(jnp.float32) for k, v in params_b.items()},
        num_heads)
    err = float(jnp.max(jnp.abs(out.astype(jnp.float32) - ref)))
    assert err < 2e-2, f"mismatch vs reference: max abs err {err}"

    # Exercise the flash (online-softmax) attention path on a longer sequence
    # (forced via flash_min_n; in production it triggers at N >= ~1024 on v7x).
    Nf = 256
    hd = C // num_heads
    scale = hd ** (-0.5)
    qkv3 = (0.5 * jax.random.normal(kq, (B, Nf, 3 * C), jnp.float32)
            ).astype(jnp.bfloat16)
    o_flash = jax.block_until_ready(
        multihead_attention(qkv3, num_heads, scale,
                            q_block=128, kv_block=128, flash_min_n=128))
    o_ref = mha_reference(qkv3.astype(jnp.float32), num_heads, scale)
    err_f = float(jnp.max(jnp.abs(o_flash.astype(jnp.float32) - o_ref)))
    assert err_f < 2e-2, f"flash path mismatch vs reference: max abs err {err_f}"

    print("KERNEL_OK")
</pallas_src>

<mosaic_0001>
module attributes {stable_mosaic.version = 11 : i64} {
  func.func @_linear_kernel(%arg0: i32, %arg1: i32, %arg2: i32, %arg3: memref<16x256xbf16, #tpu.memory_space<vmem>>, %arg4: memref<256x256xbf16, #tpu.memory_space<vmem>>, %arg5: memref<1x256xbf16, #tpu.memory_space<vmem>>, %arg6: memref<16x256xbf16, #tpu.memory_space<vmem>>, %arg7: memref<16x256xf32, #tpu.memory_space<vmem>>) attributes {dimension_semantics = [#tpu.dimension_semantics<parallel>, #tpu.dimension_semantics<parallel>, #tpu.dimension_semantics<arbitrary>], iteration_bounds = array<i64: 1, 3, 1>, scalar_prefetch = 0 : i64, scratch_operands = 1 : i64, tpu.core_type = #tpu.core_type<tc>, window_params = [{transform_indices = @transform_0, window_bounds = array<i64: 16, 256>}, {transform_indices = @transform_1, window_bounds = array<i64: 256, 256>}, {transform_indices = @transform_2, window_bounds = array<i64: 1, 256>}, {transform_indices = @transform_3, window_bounds = array<i64: 16, 256>}]} {
    %c0_i32 = arith.constant 0 : i32
    %0 = arith.cmpi eq, %arg2, %c0_i32 : i32
    %1 = arith.extui %0 : i1 to i32
    %c0_i32_0 = arith.constant 0 : i32
    %2 = arith.cmpi ne, %1, %c0_i32_0 : i32
    scf.if %2 {
      %cst_10 = arith.constant 0.000000e+00 : f32
      %12 = vector.broadcast %cst_10 : f32 to vector<16x256xf32>
      %c0_11 = arith.constant 0 : index
      %c0_12 = arith.constant 0 : index
      %13 = vector.load %arg7[%c0_11, %c0_12] : memref<16x256xf32, #tpu.memory_space<vmem>>, vector<16x256xf32>
      tpu.vector_store %arg7[%c0_11, %c0_12], %12 {strides = array<i32>} : memref<16x256xf32, #tpu.memory_space<vmem>>, vector<16x256xf32>,
    } else {
    }
    %c0 = arith.constant 0 : index
    %c0_1 = arith.constant 0 : index
    %3 = vector.load %arg7[%c0, %c0_1] : memref<16x256xf32, #tpu.memory_space<vmem>>, vector<16x256xf32>
    %c0_2 = arith.constant 0 : index
    %c0_3 = arith.constant 0 : index
    %4 = vector.load %arg3[%c0_2, %c0_3] : memref<16x256xbf16, #tpu.memory_space<vmem>>, vector<16x256xbf16>
    %c0_4 = arith.constant 0 : index
    %c0_5 = arith.constant 0 : index
    %5 = vector.load %arg4[%c0_4, %c0_5] : memref<256x256xbf16, #tpu.memory_space<vmem>>, vector<256x256xbf16>
    %cst = arith.constant dense<0.000000e+00> : vector<16x256xf32>
    %6 = tpu.matmul %4, %5, %cst {dimension_numbers = #tpu.dot_dimension_numbers<[1], [0], [0], [1], [0, 0, 1, 1], [], []>} : vector<16x256xbf16>, vector<256x256xbf16>, vector<16x256xf32> -> vector<16x256xf32>
    %7 = arith.addf %3, %6 : vector<16x256xf32>
    %c0_6 = arith.constant 0 : index
    %c0_7 = arith.constant 0 : index
    %8 = vector.load %arg7[%c0_6, %c0_7] : memref<16x256xf32, #tpu.memory_space<vmem>>, vector<16x256xf32>
    tpu.vector_store %arg7[%c0_6, %c0_7], %7 {strides = array<i32>} : memref<16x256xf32, #tpu.memory_space<vmem>>, vector<16x256xf32>,
    %c0_i32_8 = arith.constant 0 : i32
    %9 = arith.cmpi eq, %arg2, %c0_i32_8 : i32
    %10 = arith.extui %9 : i1 to i32
    %c0_i32_9 = arith.constant 0 : i32
    %11 = arith.cmpi ne, %10, %c0_i32_9 : i32
    scf.if %11 {
      %c0_10 = arith.constant 0 : index
      %c0_11 = arith.constant 0 : index
      %12 = vector.load %arg7[%c0_10, %c0_11] : memref<16x256xf32, #tpu.memory_space<vmem>>, vector<16x256xf32>
      %c0_12 = arith.constant 0 : index
      %c0_13 = arith.constant 0 : index
      %13 = vector.load %arg5[%c0_12, %c0_13] : memref<1x256xbf16, #tpu.memory_space<vmem>>, vector<1x256xbf16>
      %14 = arith.extf %13 : vector<1x256xbf16> to vector<1x256xf32>
      %15 = vector.broadcast %14 : vector<1x256xf32> to vector<16x256xf32>
      %16 = arith.addf %12, %15 : vector<16x256xf32>
      %17 = arith.truncf %16 : vector<16x256xf32> to vector<16x256xbf16>
      %c0_14 = arith.constant 0 : index
      %c0_15 = arith.constant 0 : index
      %18 = vector.load %arg6[%c0_14, %c0_15] : memref<16x256xbf16, #tpu.memory_space<vmem>>, vector<16x256xbf16>
      tpu.vector_store %arg6[%c0_14, %c0_15], %17 {strides = array<i32>} : memref<16x256xbf16, #tpu.memory_space<vmem>>, vector<16x256xbf16>,
    } else {
    }
    return
  }
  func.func @transform_0(%arg0: i32, %arg1: i32, %arg2: i32) -> (i32, i32) {
    %c0_i32 = arith.constant 0 : i32
    return %arg0, %arg2 : i32, i32
  }
  func.func @transform_1(%arg0: i32, %arg1: i32, %arg2: i32) -> (i32, i32) {
    %c0_i32 = arith.constant 0 : i32
    return %arg2, %arg1 : i32, i32
  }
  func.func @transform_2(%arg0: i32, %arg1: i32, %arg2: i32) -> (i32, i32) {
    %c0_i32 = arith.constant 0 : i32
    %c0_i32_0 = arith.constant 0 : i32
    return %c0_i32, %arg1 : i32, i32
  }
  func.func @transform_3(%arg0: i32, %arg1: i32, %arg2: i32) -> (i32, i32) {
    %c0_i32 = arith.constant 0 : i32
    return %arg0, %arg1 : i32, i32
  }
}

</mosaic_0001>

<llo_original>
// kernel: tpu_custom_call.1
$region0: #{tpu_custom_call.1}
  #allocation0 [shape = 'u32[]', space=smem, size = 0x4, offset = 0x4, fixed_abs, tag = 'smem constant byte address 0x4 - core index']
  #allocation1 [shape = 'u32[144,128]{1,0:T(1,128)}', space=vmem, size = 0x12000, scoped, tag = 'internal scratch']
  #allocation2 [shape = 'f32[16,256]{1,0:T(8,128)}', space=vmem, size = 0x4000, scoped, tag = 'scratch operand']
  %s0 = inlined_call_operand.hbm [shape: bf16[16,256], index: 0, kind: input, shape index: {}]
  %s1 = inlined_call_operand.hbm [shape: bf16[256,768], index: 1, kind: input, shape index: {}]
  %s2 = inlined_call_operand.vmem [shape: bf16[1,768], index: 2, kind: input, shape index: {}]
  %s3 = inlined_call_operand.hbm [shape: bf16[16,768], index: 3, kind: output, shape index: {}]
  %s4 = sld [smem:[#allocation0]]
  $region61: #{tpu_custom_call.1} parent=0
    _
  %s6 = ssub.s32 1, %s4
  %s7 = scalar_select 0, %s6, %s4
  $region1: #{tpu_custom_call.1} parent=0
    #allocation3 [shape = 'u8[8192]{0}', space=vmem, size = 0x2000, scoped, tag = 'input window, operand 0, single buffered']
    #allocation4 [shape = 's32[2]{0}', space=sflag, size = 0x8, scoped, tag = 'scoped memory for tpu_custom_call.1']
    #allocation5 [shape = 's32[2]{0}', space=sflag, size = 0x8, scoped, tag = 'scoped memory for tpu_custom_call.1']
    #allocation6 [shape = 'u8[262144]{0}', space=vmem, size = 0x40000, scoped, tag = 'input window, operand 1']
    #allocation7 [shape = 's32[2]{0}', space=sflag, size = 0x8, scoped, tag = 'scoped memory for tpu_custom_call.1']
    #allocation8 [shape = 'u8[16384]{0}', space=vmem, size = 0x4000, scoped, tag = 'output window, operand 0']
    %8 = vsyncpa [#allocation4], 0
    %9 = vsyncpa [#allocation7], 0
    %s10 = scalar_lea.sflag [#allocation7], 1
    %11 = vsyncpa %s10, 0
    %12 = vsyncpa [#allocation5], 0
    %s13 = scalar_lea.sflag [#allocation5], 1
    %14 = vsyncpa %s13, 0
    loop: start=0, step=1, limit=5
    $region2: #{tpu_custom_call.1} parent=1 // loop_pre_header
      _
    $region3: #{tpu_custom_call.1} parent=1 // loop_header
      %s16 = sphi 0, %s20
      %p17 = scmp.ge.s32.totalorder %s16, 5
      %s23 = sphi 0, %s42
      %s24 = sphi 0, %s38
      %s25 = sphi 0, %s34
      %s26 = sphi 0, %s23
      %s27 = sphi 0, %s24
      %s28 = sphi 0, %s25
      %s29 = sphi 0, %s26
      %s30 = sphi 0, %s27
      %s31 = sphi 0, %s28
      %s47 = sphi 0, %s49
      %s50 = sphi 0, %s47
      %s51 = sphi 0, %s50
      %s67 = sphi 0, %s51
      %s75 = sphi 0, %s77
      %s78 = sphi 0, %s75
      %s79 = sphi 0, %s78
      %s95 = sphi 0, %s79
      %s101 = sphi 0, %s103
      %s104 = sphi 0, %s101
      %s105 = sphi 0, %s104
      %s121 = sphi 0, %s105
      %s129 = sphi 0, %s131
      %s132 = sphi 0, %s129
      %s133 = sphi 0, %s132
      %s149 = sphi 0, %s133
    $region4: #{tpu_custom_call.1} parent=1 // loop_header_branch
      %19 = sbr.rel (%p17) target = $region8
    $region5: #{tpu_custom_call.1} parent=1 // loop_body
      %s21 = ssub.s32 %s16, 1
      %s22 = ssub.s32 %s16, 2
      %s32 = sadd.s32 1, %s25
      %p33 = scmp.ge.s32.totalorder %s32, 1
      %s34 = scalar_select %p33, 0, %s32
      %s35 = sadd.s32 1, %s24
      %s36 = scalar_select %p33, %s35, %s24
      %p37 = scmp.ge.s32.totalorder %s36, 3
      %s38 = scalar_select %p37, 0, %s36
      %s39 = sadd.s32 1, %s23
      %s40 = scalar_select %p37, %s39, %s23
      %p41 = scmp.ge.s32.totalorder %s40, 1
      %s42 = scalar_select %p41, 0, %s40
      %s43 = ssub.s32 %s23, %s42
      %s44 = ssub.s32 %s25, %s34
      %s45 = sor.u32 %s43, %s44
      %p46 = scmp.eq.s32.totalorder %s45, 0
      %s48 = sadd.s32 %s47, 1
      %s49 = scalar_select %p46, %s47, %s48
      %p52 = pneg %p46
      %p53 = scmp.eq.s32.totalorder %s16, 2
      %p54 = por %p52, %p53
      %p55 = scmp.ne.s32.totalorder %s47, %s50
      %p56 = scmp.eq.s32.totalorder %s16, 0
      %p57 = por %p55, %p56
      %p58 = scmp.ne.s32.totalorder %s47, %s50
      %p59 = scmp.eq.s32.totalorder %s21, 2
      %p60 = por %p58, %p59
      %p61 = scmp.ne.s32.totalorder %s50, %s51
      %p62 = scmp.eq.s32.totalorder %s21, 0
      %p63 = por %p61, %p62
      %p64 = scmp.ne.s32.totalorder %s50, %s51
      %p65 = scmp.eq.s32.totalorder %s22, 2
      %p66 = por %p64, %p65
      %p68 = scmp.ne.s32.totalorder %s51, %s67
      %p69 = scmp.eq.s32.totalorder %s22, 0
      %p70 = por %p68, %p69
      %s71 = ssub.s32 %s25, %s34
      %s72 = ssub.s32 %s24, %s38
      %s73 = sor.u32 %s71, %s72
      %p74 = scmp.eq.s32.totalorder %s73, 0
      %s76 = sadd.s32 %s75, 1
      %s77 = scalar_select %p74, %s75, %s76
      %p80 = pneg %p74
      %p81 = scmp.eq.s32.totalorder %s16, 2
      %p82 = por %p80, %p81
      %p83 = scmp.ne.s32.totalorder %s75, %s78
      %p84 = scmp.eq.s32.totalorder %s16, 0
      %p85 = por %p83, %p84
      %p86 = scmp.ne.s32.totalorder %s75, %s78
      %p87 = scmp.eq.s32.totalorder %s21, 2
      %p88 = por %p86, %p87
      %p89 = scmp.ne.s32.totalorder %s78, %s79
      %p90 = scmp.eq.s32.totalorder %s21, 0
      %p91 = por %p89, %p90
      %p92 = scmp.ne.s32.totalorder %s78, %s79
      %p93 = scmp.eq.s32.totalorder %s22, 2
      %p94 = por %p92, %p93
      %p96 = scmp.ne.s32.totalorder %s79, %s95
      %p97 = scmp.eq.s32.totalorder %s22, 0
      %p98 = por %p96, %p97
      %s99 = ssub.s32 %s24, %s38
      %p100 = scmp.eq.s32.totalorder %s99, 0
      %s102 = sadd.s32 %s101, 1
      %s103 = scalar_select %p100, %s101, %s102
      %p106 = pneg %p100
      %p107 = scmp.eq.s32.totalorder %s16, 2
      %p108 = por %p106, %p107
      %p109 = scmp.ne.s32.totalorder %s101, %s104
      %p110 = scmp.eq.s32.totalorder %s16, 0
      %p111 = por %p109, %p110
      %p112 = scmp.ne.s32.totalorder %s101, %s104
      %p113 = scmp.eq.s32.totalorder %s21, 2
      %p114 = por %p112, %p113
      %p115 = scmp.ne.s32.totalorder %s104, %s105
      %p116 = scmp.eq.s32.totalorder %s21, 0
      %p117 = por %p115, %p116
      %p118 = scmp.ne.s32.totalorder %s104, %s105
      %p119 = scmp.eq.s32.totalorder %s22, 2
      %p120 = por %p118, %p119
      %p122 = scmp.ne.s32.totalorder %s105, %s121
      %p123 = scmp.eq.s32.totalorder %s22, 0
      %p124 = por %p122, %p123
      %s125 = ssub.s32 %s23, %s42
      %s126 = ssub.s32 %s24, %s38
      %s127 = sor.u32 %s125, %s126
      %p128 = scmp.eq.s32.totalorder %s127, 0
      %s130 = sadd.s32 %s129, 1
      %s131 = scalar_select %p128, %s129, %s130
      %p134 = pneg %p128
      %p135 = scmp.eq.s32.totalorder %s16, 2
      %p136 = por %p134, %p135
      %p137 = scmp.ne.s32.totalorder %s129, %s132
      %p138 = scmp.eq.s32.totalorder %s16, 0
      %p139 = por %p137, %p138
      %p140 = scmp.ne.s32.totalorder %s129, %s132
      %p141 = scmp.eq.s32.totalorder %s21, 2
      %p142 = por %p140, %p141
      %p143 = scmp.ne.s32.totalorder %s132, %s133
      %p144 = scmp.eq.s32.totalorder %s21, 0
      %p145 = por %p143, %p144
      %p146 = scmp.ne.s32.totalorder %s132, %s133
      %p147 = scmp.eq.s32.totalorder %s22, 2
      %p148 = por %p146, %p147
      %p150 = scmp.ne.s32.totalorder %s133, %s149
      %p151 = scmp.eq.s32.totalorder %s22, 0
      %p152 = por %p150, %p151
      %p153 = scmp.le.s32.totalorder 1, %s16
      %p154 = scmp.lt.s32.totalorder %s16, 4
      %p155 = pnand %p153, %p154
      %p156 = pneg %p155
      // Predicated region
      $region9: #{tpu_custom_call.1} parent=5 // pred_check
        _
      $region10: #{tpu_custom_call.1} parent=5 // pred_check_branch
        %158 = sbr.rel (%p155) target = $region12
      $region11: #{tpu_custom_call.1} parent=5 // pred_region
        %s159 = ssub.s32 %s16, 1
        // Predicated region
        $region13: #{tpu_custom_call.1} parent=11 // pred_check
          %p160 = pneg %p63
        $region14: #{tpu_custom_call.1} parent=11 // pred_check_branch
          %162 = sbr.rel (%p160) target = $region16
        $region15: #{tpu_custom_call.1} parent=11 // pred_region
          %s163 = smul.u32 2, %s26
          %s164 = smul.u32 2, %s28
          %s166 = ssub.s32 256, 256
          %167 = vsyncadd [#allocation4], %s166
          %s168 = smul.addr %s163, 2
          %s169 = sadd.s32 %s164, %s168
          %s170 = smul.addr %s169, 64
          %s171 = scalar_lea.hbm %s0, %s170
          %s172 = sshll.u32 [#allocation3], 4
          %s173 = int_to_ptr.vmem [resolvable:$true] %s172
          %178 = dma.hbm_to_vmem [thread:$0]  %s171, 256, %s173, [#allocation4], 128, 128, 8
        $region16: #{tpu_custom_call.1} parent=11 // pred_fallthru
          _
      $region12: #{tpu_custom_call.1} parent=5 // pred_fallthru
        _
      %p179 = scmp.lt.s32.totalorder %s16, 3
      // Predicated region
      $region17: #{tpu_custom_call.1} parent=5 // pred_check
        %p180 = pneg %p179
      $region18: #{tpu_custom_call.1} parent=5 // pred_check_branch
        %182 = sbr.rel (%p180) target = $region20
      $region19: #{tpu_custom_call.1} parent=5 // pred_region
        // Predicated region
        $region21: #{tpu_custom_call.1} parent=19 // pred_check
          %p183 = pneg %p85
        $region22: #{tpu_custom_call.1} parent=19 // pred_check_branch
          %185 = sbr.rel (%p183) target = $region24
        $region23: #{tpu_custom_call.1} parent=19 // pred_region
          %s186 = sand.u32 %s75, 1
          %s187 = scalar_lea.sflag [#allocation7], %s186
          %s188 = sand.u32 %s75, 1
          %s189 = smul.addr %s188, 256
          %s190 = scalar_lea.vmem [#allocation6], %s189
          %s191 = smul.u32 32, %s25
          %s192 = smul.u32 2, %s24
          %s194 = ssub.s32 4096, 4096
          %195 = vsyncadd %s187, %s194
          %s196 = smul.addr %s191, 6
          %s197 = sadd.s32 %s192, %s196
          %s198 = smul.addr %s197, 64
          %s199 = scalar_lea.hbm %s1, %s198
          %s200 = sshll.u32 %s190, 4
          %s201 = int_to_ptr.vmem [resolvable:$true] %s200
          %206 = dma.hbm_to_vmem [thread:$0]  %s199, 4096, %s201, %s187, 384, 128, 8
        $region24: #{tpu_custom_call.1} parent=19 // pred_fallthru
          _
        // Predicated region
        $region25: #{tpu_custom_call.1} parent=19 // pred_check
          %p207 = pneg %p111
        $region26: #{tpu_custom_call.1} parent=19 // pred_check_branch
          %209 = sbr.rel (%p207) target = $region28
        $region27: #{tpu_custom_call.1} parent=19 // pred_region
          %s210 = smul.u32 2, %s24
          %p211 = scmp.lt.s32.totalorder %s210, 5
          %s212 = scalar_select %p211, %s210, 5
          %s213 = scalar_lea.vmem %s2, %s212
          %s214 = smul.u32 2, %s24
        $region28: #{tpu_custom_call.1} parent=19 // pred_fallthru
          _
      $region20: #{tpu_custom_call.1} parent=5 // pred_fallthru
        _
      %p215 = scmp.le.s32.totalorder 1, %s16
      %p216 = scmp.lt.s32.totalorder %s16, 4
      %p217 = pnand %p215, %p216
      %p218 = pneg %p217
      // Predicated region
      $region29: #{tpu_custom_call.1} parent=5 // pred_check
        _
      $region30: #{tpu_custom_call.1} parent=5 // pred_check_branch
        %220 = sbr.rel (%p217) target = $region32
      $region31: #{tpu_custom_call.1} parent=5 // pred_region
        %s221 = ssub.s32 %s16, 1
        // Predicated region
        $region33: #{tpu_custom_call.1} parent=31 // pred_check
          %p222 = pneg %p63
        $region34: #{tpu_custom_call.1} parent=31 // pred_check_branch
          %224 = sbr.rel (%p222) target = $region36
        $region35: #{tpu_custom_call.1} parent=31 // pred_region
          %225 = dma.done [#allocation4], 256
        $region36: #{tpu_custom_call.1} parent=31 // pred_fallthru
          _
        %s226 = sand.u32 %s78, 1
        %s227 = scalar_lea.sflag [#allocation7], %s226
        %s228 = sand.u32 %s78, 1
        %s229 = smul.addr %s228, 256
        %s230 = scalar_lea.vmem [#allocation6], %s229
        // Predicated region
        $region37: #{tpu_custom_call.1} parent=31 // pred_check
          %p231 = pneg %p91
        $region38: #{tpu_custom_call.1} parent=31 // pred_check_branch
          %233 = sbr.rel (%p231) target = $region40
        $region39: #{tpu_custom_call.1} parent=31 // pred_region
          %234 = dma.done %s227, 4096
        $region40: #{tpu_custom_call.1} parent=31 // pred_fallthru
          _
        %p235 = pneg %p63
        %p236 = pneg %p60
        %s237 = sand.u32 %s78, 1
        %s238 = scalar_lea.sflag [#allocation7], %s237
        %s239 = sand.u32 %s78, 1
        %s240 = smul.addr %s239, 256
        %s241 = scalar_lea.vmem [#allocation6], %s240
        %p242 = pneg %p91
        %p243 = pneg %p88
        %s244 = smul.u32 2, %s27
        %p245 = scmp.lt.s32.totalorder %s244, 5
        %s246 = scalar_select %p245, %s244, 5
        %s247 = scalar_lea.vmem %s2, %s246
        %p248 = pneg %p117
        %p249 = pneg %p114
        %p250 = pneg %p145
        %p251 = pneg %p142
        %s252 = sand.u32 %s132, 1
        %s253 = scalar_lea.sflag [#allocation5], %s252
        %s254 = sand.u32 %s132, 1
        %s255 = smul.addr %s254, 16
        %s256 = scalar_lea.vmem [#allocation8], %s255
        %s257 = smul.u32 2, %s26
        %s258 = smul.u32 2, %s28
        %s259 = smul.u32 32, %s28
        %s260 = smul.u32 2, %s27
        %s261 = smul.u32 2, %s27
        %p262 = scmp.lt.s32.totalorder %s261, 5
        %s263 = scalar_select %p262, %s261, 5
        %s264 = scalar_lea.vmem %s2, %s263
        %s265 = smul.u32 2, %s27
        %s266 = smul.u32 2, %s26
        %s267 = smul.u32 2, %s27
        %p268 = scmp.eq.s32.totalorder %s28, 0
        // Predicated region
        $region41: #{tpu_custom_call.1} parent=31 // pred_check
          %p269 = pneg %p268
        $region42: #{tpu_custom_call.1} parent=31 // pred_check_branch
          %271 = sbr.rel (%p269) target = $region44
        $region43: #{tpu_custom_call.1} parent=31 // pred_region
          %272 = vst [vmem:[#allocation2] sm:$0xff] 0.0
          %273 = vst [vmem:[#allocation2 + $0x8] sm:$0xff] 0.0
          %274 = vst [vmem:[#allocation2 + $0x10] sm:$0xff] 0.0
          %275 = vst [vmem:[#allocation2 + $0x18] sm:$0xff] 0.0
        $region44: #{tpu_custom_call.1} parent=31 // pred_fallthru
          _
        %v276 = vld [vmem:[#allocation2] sm:$0xff]
        %v277 = vld [vmem:[#allocation2 + $0x8] sm:$0xff]
        %v278 = vld [vmem:[#allocation2 + $0x10] sm:$0xff]
        %v279 = vld [vmem:[#allocation2 + $0x18] sm:$0xff]
        %v280 = vld [vmem:[#allocation3] sm:$0xff]
        %v281 = vld [vmem:[#allocation3 + $0x8] sm:$0xff]
        %v282 = vld [vmem:[%s230] sm:$0xff]
        %v283 = vld [vmem:[%s230 + $0x8] sm:$0xff]
        %v284 = vld [vmem:[%s230 + $0x10] sm:$0xff]
        %v285 = vld [vmem:[%s230 + $0x18] sm:$0xff]
        %v286 = vld [vmem:[%s230 + $0x20] sm:$0xff]
        %v287 = vld [vmem:[%s230 + $0x28] sm:$0xff]
        %v288 = vld [vmem:[%s230 + $0x30] sm:$0xff]
        %v289 = vld [vmem:[%s230 + $0x38] sm:$0xff]
        %v290 = vld [vmem:[%s230 + $0x40] sm:$0xff]
        %v291 = vld [vmem:[%s230 + $0x48] sm:$0xff]
        %v292 = vld [vmem:[%s230 + $0x50] sm:$0xff]
        %v293 = vld [vmem:[%s230 + $0x58] sm:$0xff]
        %v294 = vld [vmem:[%s230 + $0x60] sm:$0xff]
        %v295 = vld [vmem:[%s230 + $0x68] sm:$0xff]
        %v296 = vld [vmem:[%s230 + $0x70] sm:$0xff]
        %v297 = vld [vmem:[%s230 + $0x78] sm:$0xff]
        %v298 = vld [vmem:[%s230 + $0x80] sm:$0xff]
        %v299 = vld [vmem:[%s230 + $0x88] sm:$0xff]
        %v300 = vld [vmem:[%s230 + $0x90] sm:$0xff]
        %v301 = vld [vmem:[%s230 + $0x98] sm:$0xff]
        %v302 = vld [vmem:[%s230 + $0xa0] sm:$0xff]
        %v303 = vld [vmem:[%s230 + $0xa8] sm:$0xff]
        %v304 = vld [vmem:[%s230 + $0xb0] sm:$0xff]
        %v305 = vld [vmem:[%s230 + $0xb8] sm:$0xff]
        %v306 = vld [vmem:[%s230 + $0xc0] sm:$0xff]
        %v307 = vld [vmem:[%s230 + $0xc8] sm:$0xff]
        %v308 = vld [vmem:[%s230 + $0xd0] sm:$0xff]
        %v309 = vld [vmem:[%s230 + $0xd8] sm:$0xff]
        %v310 = vld [vmem:[%s230 + $0xe0] sm:$0xff]
        %v311 = vld [vmem:[%s230 + $0xe8] sm:$0xff]
        %v312 = vld [vmem:[%s230 + $0xf0] sm:$0xff]
        %v313 = vld [vmem:[%s230 + $0xf8] sm:$0xff]
        %v316 = vunpack.c.l.b16 %v280
        %v317 = vunpack.c.h.b16 %v280
        %v318 = vunpack.c.l.b16 %v281
        %v319 = vunpack.c.h.b16 %v281
        %v320 = vpack.c.b16 %v318, %v316
        %v321 = vpack.c.b16 %v319, %v317
        %v356 = vunpack.c.l.b16 %v282
        %v357 = vunpack.c.h.b16 %v282
        %v358 = vunpack.c.l.b16 %v283
        %v359 = vunpack.c.h.b16 %v283
        %v360 = vunpack.c.l.b16 %v284
        %v361 = vunpack.c.h.b16 %v284
        %v362 = vunpack.c.l.b16 %v285
        %v363 = vunpack.c.h.b16 %v285
        %v364 = vunpack.c.l.b16 %v286
        %v365 = vunpack.c.h.b16 %v286
        %v366 = vunpack.c.l.b16 %v287
        %v367 = vunpack.c.h.b16 %v287
        %v368 = vunpack.c.l.b16 %v288
        %v369 = vunpack.c.h.b16 %v288
        %v370 = vunpack.c.l.b16 %v289
        %v371 = vunpack.c.h.b16 %v289
        %v372 = vunpack.c.l.b16 %v290
        %v373 = vunpack.c.h.b16 %v290
        %v374 = vunpack.c.l.b16 %v291
        %v375 = vunpack.c.h.b16 %v291
        %v376 = vunpack.c.l.b16 %v292
        %v377 = vunpack.c.h.b16 %v292
        %v378 = vunpack.c.l.b16 %v293
        %v379 = vunpack.c.h.b16 %v293
        %v380 = vunpack.c.l.b16 %v294
        %v381 = vunpack.c.h.b16 %v294
        %v382 = vunpack.c.l.b16 %v295
        %v383 = vunpack.c.h.b16 %v295
        %v384 = vunpack.c.l.b16 %v296
        %v385 = vunpack.c.h.b16 %v296
        %v386 = vunpack.c.l.b16 %v297
        %v387 = vunpack.c.h.b16 %v297
        %v388 = vunpack.c.l.b16 %v298
        %v389 = vunpack.c.h.b16 %v298
        %v390 = vunpack.c.l.b16 %v299
        %v391 = vunpack.c.h.b16 %v299
        %v392 = vunpack.c.l.b16 %v300
        %v393 = vunpack.c.h.b16 %v300
        %v394 = vunpack.c.l.b16 %v301
        %v395 = vunpack.c.h.b16 %v301
        %v396 = vunpack.c.l.b16 %v302
        %v397 = vunpack.c.h.b16 %v302
        %v398 = vunpack.c.l.b16 %v303
        %v399 = vunpack.c.h.b16 %v303
        %v400 = vunpack.c.l.b16 %v304
        %v401 = vunpack.c.h.b16 %v304
        %v402 = vunpack.c.l.b16 %v305
        %v403 = vunpack.c.h.b16 %v305
        %v404 = vunpack.c.l.b16 %v306
        %v405 = vunpack.c.h.b16 %v306
        %v406 = vunpack.c.l.b16 %v307
        %v407 = vunpack.c.h.b16 %v307
        %v408 = vunpack.c.l.b16 %v308
        %v409 = vunpack.c.h.b16 %v308
        %v410 = vunpack.c.l.b16 %v309
        %v411 = vunpack.c.h.b16 %v309
        %v412 = vunpack.c.l.b16 %v310
        %v413 = vunpack.c.h.b16 %v310
        %v414 = vunpack.c.l.b16 %v311
        %v415 = vunpack.c.h.b16 %v311
        %v416 = vunpack.c.l.b16 %v312
        %v417 = vunpack.c.h.b16 %v312
        %v418 = vunpack.c.l.b16 %v313
        %v419 = vunpack.c.h.b16 %v313
        %v420 = vpack.c.b16 %v358, %v356
        %v421 = vpack.c.b16 %v359, %v357
        %v422 = vpack.c.b16 %v362, %v360
        %v423 = vpack.c.b16 %v363, %v361
        %v424 = vpack.c.b16 %v366, %v364
        %v425 = vpack.c.b16 %v367, %v365
        %v426 = vpack.c.b16 %v370, %v368
        %v427 = vpack.c.b16 %v371, %v369
        %v428 = vpack.c.b16 %v374, %v372
        %v429 = vpack.c.b16 %v375, %v373
        %v430 = vpack.c.b16 %v378, %v376
        %v431 = vpack.c.b16 %v379, %v377
        %v432 = vpack.c.b16 %v382, %v380
        %v433 = vpack.c.b16 %v383, %v381
        %v434 = vpack.c.b16 %v386, %v384
        %v435 = vpack.c.b16 %v387, %v385
        %v436 = vpack.c.b16 %v390, %v388
        %v437 = vpack.c.b16 %v391, %v389
        %v438 = vpack.c.b16 %v394, %v392
        %v439 = vpack.c.b16 %v395, %v393
        %v440 = vpack.c.b16 %v398, %v396
        %v441 = vpack.c.b16 %v399, %v397
        %v442 = vpack.c.b16 %v402, %v400
        %v443 = vpack.c.b16 %v403, %v401
        %v444 = vpack.c.b16 %v406, %v404
        %v445 = vpack.c.b16 %v407, %v405
        %v446 = vpack.c.b16 %v410, %v408
        %v447 = vpack.c.b16 %v411, %v409
        %v448 = vpack.c.b16 %v414, %v412
        %v449 = vpack.c.b16 %v415, %v413
        %v450 = vpack.c.b16 %v418, %v416
        %v451 = vpack.c.b16 %v419, %v417
        %484 = vmatprep.subr.bf16.mxu0 %v421
        %485 = vmatpush1.bf16.msra.mxu0 %v420
        %486 = vmatprep.subr.bf16.mxu0 %v423
        %487 = vmatpush1.bf16.msra.mxu0 %v422
        %488 = vmatprep.subr.bf16.mxu0 %v425
        %489 = vmatpush1.bf16.msra.mxu0 %v424
        %490 = vmatprep.subr.bf16.mxu0 %v427
        %491 = vmatpush1.bf16.msra.mxu0 %v426
        %492 = vmatprep.subr.bf16.mxu0 %v429
        %493 = vmatpush1.bf16.msra.mxu0 %v428
        %494 = vmatprep.subr.bf16.mxu0 %v431
        %495 = vmatpush1.bf16.msra.mxu0 %v430
        %496 = vmatprep.subr.bf16.mxu0 %v433
        %497 = vmatpush1.bf16.msra.mxu0 %v432
        %498 = vmatprep.subr.bf16.mxu0 %v435
        %499 = vmatpush1.bf16.msra.mxu0 %v434
        %500 = vmatprep.subr.bf16.mxu0 %v437
        %501 = vmatpush1.bf16.msra.mxu0 %v436
        %502 = vmatprep.subr.bf16.mxu0 %v439
        %503 = vmatpush1.bf16.msra.mxu0 %v438
        %504 = vmatprep.subr.bf16.mxu0 %v441
        %505 = vmatpush1.bf16.msra.mxu0 %v440
        %506 = vmatprep.subr.bf16.mxu0 %v443
        %507 = vmatpush1.bf16.msra.mxu0 %v442
        %508 = vmatprep.subr.bf16.mxu0 %v445
        %509 = vmatpush1.bf16.msra.mxu0 %v444
        %510 = vmatprep.subr.bf16.mxu0 %v447
        %511 = vmatpush1.bf16.msra.mxu0 %v446
        %512 = vmatprep.subr.bf16.mxu0 %v449
        %513 = vmatpush1.bf16.msra.mxu0 %v448
        %514 = vmatprep.subr.bf16.mxu0 %v451
        %515 = vmatpush1.bf16.msra.mxu0 %v450
        %516 = vmatprep.mubr.bf16.mxu0 %v321
        %517 = vmatmul.mubr.bf16.gmra.mrb[0].mxu0 %v320
        %v518 = vpop.f32.mrb[0].mxu0
        %v519 = vadd.f32 0.0, %v518
        %v520 = vpop.f32.mrb[0].mxu0
        %v521 = vadd.f32 0.0, %v520
        %v522 = vpop.f32.mrb[0].mxu0
        %v523 = vadd.f32 0.0, %v522
        %v524 = vpop.f32.mrb[0].mxu0
        %v525 = vadd.f32 0.0, %v524
        %526 = vdwg.mxu0
        %v527 = vadd.f32 %v276, %v519
        %v528 = vadd.f32 %v277, %v521
        %v529 = vadd.f32 %v278, %v523
        %v530 = vadd.f32 %v279, %v525
        %531 = vst [vmem:[#allocation2] sm:$0xff] %v527
        %532 = vst [vmem:[#allocation2 + $0x8] sm:$0xff] %v528
        %533 = vst [vmem:[#allocation2 + $0x10] sm:$0xff] %v529
        %534 = vst [vmem:[#allocation2 + $0x18] sm:$0xff] %v530
        // Predicated region
        $region45: #{tpu_custom_call.1} parent=31 // pred_check
          %p535 = pneg %p268
        $region46: #{tpu_custom_call.1} parent=31 // pred_check_branch
          %537 = sbr.rel (%p535) target = $region48
        $region47: #{tpu_custom_call.1} parent=31 // pred_region
          %v538 = vld [vmem:[#allocation2] sm:$0xff]
          %v539 = vld [vmem:[#allocation2 + $0x8] sm:$0xff]
          %v540 = vld [vmem:[#allocation2 + $0x10] sm:$0xff]
          %v541 = vld [vmem:[#allocation2 + $0x18] sm:$0xff]
          %v542 = vld [vmem:[%s264] sm:$0x3]
          %v543 = vunpack.c.l.bf16 %v542
          %v545 = vlaneseq
          %v546 = vshrl.u32 %v545, 7
          %v547 = vsub.s32 0, %v546
          %v548 = vrot.slane %v543, %v547
          %v549 = vlaneseq
          %v550 = vshrl.u32 %v549, 7
          %v551 = vsub.s32 2, %v550
          %v552 = vrot.slane %v543, %v551
          %v555 = vlaneseq
          %v556 = vshrl.u32 %v555, 7
          %v557 = vsub.s32 0, %v556
          %v558 = vrot.slane %v548, %v557
          %v559 = vlaneseq
          %v560 = vshrl.u32 %v559, 7
          %v561 = vsub.s32 0, %v560
          %v562 = vrot.slane %v552, %v561
          %v563 = vadd.f32 %v538, %v558
          %v564 = vadd.f32 %v539, %v562
          %v565 = vadd.f32 %v540, %v558
          %v566 = vadd.f32 %v541, %v562
          %v567 = vpack.c.bf16 %v565, %v563
          %v568 = vpack.c.bf16 %v566, %v564
          %v571 = vunpack.c.l.b16 %v567
          %v572 = vunpack.c.l.b16 %v568
          %v573 = vunpack.c.h.b16 %v567
          %v574 = vunpack.c.h.b16 %v568
          %v575 = vpack.c.b16 %v572, %v571
          %v576 = vpack.c.b16 %v574, %v573
          %579 = vst [vmem:[%s256] sm:$0xff] %v575
          %580 = vst [vmem:[%s256 + $0x8] sm:$0xff] %v576
        $region48: #{tpu_custom_call.1} parent=31 // pred_fallthru
          _
        %s581 = sand.u32 %s132, 1
        %s582 = scalar_lea.sflag [#allocation5], %s581
        %s583 = sand.u32 %s132, 1
        %s584 = smul.addr %s583, 16
        %s585 = scalar_lea.vmem [#allocation8], %s584
        // Predicated region
        $region49: #{tpu_custom_call.1} parent=31 // pred_check
          %p586 = pneg %p142
        $region50: #{tpu_custom_call.1} parent=31 // pred_check_branch
          %588 = sbr.rel (%p586) target = $region52
        $region51: #{tpu_custom_call.1} parent=31 // pred_region
          %s589 = smul.u32 2, %s26
          %s590 = smul.u32 2, %s27
          %s592 = ssub.s32 256, 256
          %593 = vsyncadd %s582, %s592
          %s594 = smul.addr %s589, 6
          %s595 = sadd.s32 %s590, %s594
          %s596 = smul.addr %s595, 64
          %s597 = scalar_lea.hbm %s3, %s596
          %s598 = sshll.u32 %s585, 4
          %s599 = int_to_ptr.vmem [resolvable:$true] %s598
          %604 = dma.vmem_to_hbm [thread:$0]  %s599, 256, %s597, %s582, 128, 384, 8
        $region52: #{tpu_custom_call.1} parent=31 // pred_fallthru
          _
      $region32: #{tpu_custom_call.1} parent=5 // pred_fallthru
        _
      %p605 = scmp.le.s32.totalorder 2, %s16
      // Predicated region
      $region53: #{tpu_custom_call.1} parent=5 // pred_check
        %p606 = pneg %p605
      $region54: #{tpu_custom_call.1} parent=5 // pred_check_branch
        %608 = sbr.rel (%p606) target = $region56
      $region55: #{tpu_custom_call.1} parent=5 // pred_region
        %s609 = ssub.s32 %s16, 2
        // Predicated region
        $region57: #{tpu_custom_call.1} parent=55 // pred_check
          %p610 = pneg %p148
        $region58: #{tpu_custom_call.1} parent=55 // pred_check_branch
          %612 = sbr.rel (%p610) target = $region60
        $region59: #{tpu_custom_call.1} parent=55 // pred_region
          %s613 = sand.u32 %s133, 1
          %s614 = scalar_lea.sflag [#allocation5], %s613
          %s615 = sand.u32 %s133, 1
          %s616 = smul.addr %s615, 16
          %s617 = scalar_lea.vmem [#allocation8], %s616
          %618 = dma.done %s614, 256
        $region60: #{tpu_custom_call.1} parent=55 // pred_fallthru
          _
      $region56: #{tpu_custom_call.1} parent=5 // pred_fallthru
        _
    $region6: #{tpu_custom_call.1} parent=1 // loop_footer
      %s20 = sadd.s32 1, %s16
    $region7: #{tpu_custom_call.1} parent=1 // loop_footer_branch
      %15 = sbr.rel target = $region3
    $region8: #{tpu_custom_call.1} parent=1 // loop_exit
      _
    %619 = vsyncpa [#allocation4], 1
    %s620 = scalar_lea.sflag [#allocation4], 1
    %621 = vsyncpa %s620, 1
    %622 = vsyncpa [#allocation7], 1
    %s623 = scalar_lea.sflag [#allocation7], 1
    %624 = vsyncpa %s623, 1
    %625 = vsyncpa [#allocation5], 1
    %s626 = scalar_lea.sflag [#allocation5], 1
    %627 = vsyncpa %s626, 1

</llo_original>
